<compile_context>
chip_gen: v7x
topology: tpu7x:2x2x1
jax: 0.10.0
libtpu: 0.0.40
codegen_flags: <defaults>
</compile_context>

<pallas_src>
import functools

import jax
import jax.numpy as jnp
from jax.experimental import pallas as pl
from jax.experimental.pallas import tpu as pltpu


def _round_up(x, m):
    return (x + m - 1) // m * m


def _mlp_kernel(*refs, n_layers_total, use_mask, matmul_dtype):
    # refs = (x, W0, b0, ..., W_{L-1}, b_{L-1}, [dropout_mask], out)
    x_ref = refs[0]
    wb = refs[1:1 + 2 * n_layers_total]
    mask_ref = refs[1 + 2 * n_layers_total] if use_mask else None
    out_ref = refs[-1]

    h = x_ref[...].astype(jnp.float32)
    for i in range(n_layers_total - 1):
        w = wb[2 * i][...].astype(matmul_dtype)
        b = wb[2 * i + 1][...]
        h = jnp.dot(h.astype(matmul_dtype), w,
                    preferred_element_type=jnp.float32) + b     # Linear
        h = jnp.maximum(h, 0.0)                                  # ReLU
        if use_mask:                                             # Dropout
            h = h * mask_ref[i]                                  # pre-scaled mask
    w = wb[2 * (n_layers_total - 1)][...].astype(matmul_dtype)
    b = wb[2 * (n_layers_total - 1) + 1][...]
    out = jnp.dot(h.astype(matmul_dtype), w,
                  preferred_element_type=jnp.float32) + b        # final Linear
    out_ref[...] = out.astype(out_ref.dtype)


def forecasting_forward(params, x, *, dropout_p, training,
                        dropout_masks=None, rng_key=None,
                        matmul_dtype=jnp.float32, block_m=128):
    """Forward pass of Forecasting_Model in one Pallas kernel.

    params: list of (W, b) with W pre-transposed as [in_features, out_features].
    """
    n_layers_total = len(params)       # n_layers hidden-ish layers + final
    n_hidden = n_layers_total - 1
    batch, in_dim = x.shape
    hid_dim = params[0][0].shape[1]
    out_dim = params[-1][0].shape[1]

    # Tiling: batch tiled by bm (multiple of 8), features padded to 128 lanes.
    bm = min(block_m, _round_up(batch, 8))
    padded_batch = _round_up(batch, bm)
    in_pad = _round_up(in_dim, 128)
    hid_pad = _round_up(hid_dim, 128)
    out_pad = _round_up(out_dim, 128)

    xp = jnp.zeros((padded_batch, in_pad), jnp.float32).at[:batch, :in_dim].set(x)

    flat = []
    in_specs = [pl.BlockSpec((bm, in_pad), lambda i: (i, 0))]
    for li, (w, b) in enumerate(params):
        di, do = w.shape
        dpi = in_pad if li == 0 else hid_pad
        dpo = out_pad if li == n_layers_total - 1 else hid_pad
        wp = jnp.zeros((dpi, dpo), jnp.float32).at[:di, :do].set(w)
        bp = jnp.zeros((1, dpo), jnp.float32).at[:, :do].set(b.reshape(1, -1))
        flat += [wp, bp]
        in_specs += [pl.BlockSpec((dpi, dpo), lambda i: (0, 0)),
                     pl.BlockSpec((1, dpo), lambda i: (0, 0))]

    use_mask = bool(training) and dropout_p > 0.0 and n_hidden > 0
    if use_mask:
        if dropout_masks is None:
            if rng_key is None:
                rng_key = jax.random.PRNGKey(0)
            keep = jax.random.bernoulli(rng_key, 1.0 - dropout_p,
                                        (n_hidden, batch, hid_dim))
            dropout_masks = keep.astype(jnp.float32) / (1.0 - dropout_p)
        mp = jnp.zeros((n_hidden, padded_batch, hid_pad), jnp.float32)
        mp = mp.at[:, :batch, :hid_dim].set(dropout_masks.astype(jnp.float32))
        flat.append(mp)
        in_specs.append(pl.BlockSpec((n_hidden, bm, hid_pad), lambda i: (0, i, 0)))

    kernel = functools.partial(_mlp_kernel, n_layers_total=n_layers_total,
                               use_mask=use_mask, matmul_dtype=matmul_dtype)

    out = pl.pallas_call(
        kernel,
        out_shape=jax.ShapeDtypeStruct((padded_batch, out_pad), jnp.float32),
        grid=(padded_batch // bm,),
        in_specs=in_specs,
        out_specs=pl.BlockSpec((bm, out_pad), lambda i: (i, 0)),
        compiler_params=pltpu.CompilerParams(
            dimension_semantics=("parallel",),
            vmem_limit_bytes=32 * 1024 * 1024),
    )(xp, *flat)
    return out[:batch, :out_dim]


def init_params(key, in_dim, hid_dim, out_dim, n_layers):
    """PyTorch-default-like init: U(-1/sqrt(fan_in), 1/sqrt(fan_in))."""
    dims = [in_dim] + [hid_dim] * n_layers + [out_dim]
    params = []
    for d_in, d_out in zip(dims[:-1], dims[1:]):
        key, kw, kb = jax.random.split(key, 3)
        bound = 1.0 / (d_in ** 0.5)
        w = jax.random.uniform(kw, (d_in, d_out), jnp.float32, -bound, bound)
        b = jax.random.uniform(kb, (1, d_out), jnp.float32, -bound, bound)
        params.append((w, b))
    return params


def forecasting_ref(params, x, dropout_masks=None):
    """Pure-JAX reference."""
    h = x
    for i, (w, b) in enumerate(params[:-1]):
        h = jnp.maximum(h @ w + b, 0.0)
        if dropout_masks is not None:
            h = h * dropout_masks[i]
    w, b = params[-1]
    return h @ w + b


if __name__ == "__main__":
    in_dim, hid_dim, out_dim, n_layers, dropout = 32, 64, 16, 3, 0.1
    batch = 48

    key = jax.random.PRNGKey(0)
    key, kx, kmask = jax.random.split(key, 3)
    params = init_params(key, in_dim, hid_dim, out_dim, n_layers)
    x = jax.random.normal(kx, (batch, in_dim), jnp.float32)

    # Eval mode (dropout = identity), f32 matmuls, checked against pure JAX.
    y = forecasting_forward(params, x, dropout_p=dropout, training=False,
                            block_m=16)
    y_ref = forecasting_ref(params, x)
    jax.block_until_ready(y)
    assert y.shape == (batch, out_dim)
    assert jnp.allclose(y, y_ref, atol=1e-5, rtol=1e-5)

    # Training mode: same pre-scaled Bernoulli masks fed to kernel + reference.
    keep = jax.random.bernoulli(kmask, 1.0 - dropout, (n_layers, batch, hid_dim))
    masks = keep.astype(jnp.float32) / (1.0 - dropout)
    y_t = forecasting_forward(params, x, dropout_p=dropout, training=True,
                              dropout_masks=masks, block_m=16)
    y_t_ref = forecasting_ref(params, x, dropout_masks=masks)
    jax.block_until_ready(y_t)
    assert jnp.allclose(y_t, y_t_ref, atol=1e-5, rtol=1e-5)

    # bf16 MXU-input variant (f32 accumulation) — the v6e/v7x fast path.
    y_bf = forecasting_forward(params, x, dropout_p=dropout, training=False,
                               matmul_dtype=jnp.bfloat16, block_m=16)
    jax.block_until_ready(y_bf)
    assert y_bf.shape == (batch, out_dim)
    assert jnp.allclose(y_bf, y_ref, atol=0.1, rtol=0.1)

    print("KERNEL_OK")
</pallas_src>

<mosaic_0001>
module attributes {stable_mosaic.version = 11 : i64} {
  func.func @_mlp_kernel(%arg0: i32, %arg1: memref<16x128xf32, #tpu.memory_space<vmem>>, %arg2: memref<128x128xf32, #tpu.memory_space<vmem>>, %arg3: memref<1x128xf32, #tpu.memory_space<vmem>>, %arg4: memref<128x128xf32, #tpu.memory_space<vmem>>, %arg5: memref<1x128xf32, #tpu.memory_space<vmem>>, %arg6: memref<128x128xf32, #tpu.memory_space<vmem>>, %arg7: memref<1x128xf32, #tpu.memory_space<vmem>>, %arg8: memref<128x128xf32, #tpu.memory_space<vmem>>, %arg9: memref<1x128xf32, #tpu.memory_space<vmem>>, %arg10: memref<16x128xf32, #tpu.memory_space<vmem>>) attributes {dimension_semantics = [#tpu.dimension_semantics<parallel>], iteration_bounds = array<i64: 3>, scalar_prefetch = 0 : i64, scratch_operands = 0 : i64, tpu.core_type = #tpu.core_type<tc>, window_params = [{transform_indices = @transform_0, window_bounds = array<i64: 16, 128>}, {pipeline_mode = #tpu.pipeline_mode<synchronous>, transform_indices = @transform_1, window_bounds = array<i64: 128, 128>}, {pipeline_mode = #tpu.pipeline_mode<synchronous>, transform_indices = @transform_2, window_bounds = array<i64: 1, 128>}, {pipeline_mode = #tpu.pipeline_mode<synchronous>, transform_indices = @transform_3, window_bounds = array<i64: 128, 128>}, {pipeline_mode = #tpu.pipeline_mode<synchronous>, transform_indices = @transform_4, window_bounds = array<i64: 1, 128>}, {pipeline_mode = #tpu.pipeline_mode<synchronous>, transform_indices = @transform_5, window_bounds = array<i64: 128, 128>}, {pipeline_mode = #tpu.pipeline_mode<synchronous>, transform_indices = @transform_6, window_bounds = array<i64: 1, 128>}, {pipeline_mode = #tpu.pipeline_mode<synchronous>, transform_indices = @transform_7, window_bounds = array<i64: 128, 128>}, {pipeline_mode = #tpu.pipeline_mode<synchronous>, transform_indices = @transform_8, window_bounds = array<i64: 1, 128>}, {transform_indices = @transform_9, window_bounds = array<i64: 16, 128>}]} {
    %c0 = arith.constant 0 : index
    %c0_0 = arith.constant 0 : index
    %0 = vector.load %arg1[%c0, %c0_0] : memref<16x128xf32, #tpu.memory_space<vmem>>, vector<16x128xf32>
    %c0_1 = arith.constant 0 : index
    %c0_2 = arith.constant 0 : index
    %1 = vector.load %arg2[%c0_1, %c0_2] : memref<128x128xf32, #tpu.memory_space<vmem>>, vector<128x128xf32>
    %c0_3 = arith.constant 0 : index
    %c0_4 = arith.constant 0 : index
    %2 = vector.load %arg3[%c0_3, %c0_4] : memref<1x128xf32, #tpu.memory_space<vmem>>, vector<1x128xf32>
    %cst = arith.constant dense<0.000000e+00> : vector<16x128xf32>
    %3 = tpu.matmul %0, %1, %cst {dimension_numbers = #tpu.dot_dimension_numbers<[1], [0], [0], [1], [0, 0, 1, 1], [], []>} : vector<16x128xf32>, vector<128x128xf32>, vector<16x128xf32> -> vector<16x128xf32>
    %4 = vector.broadcast %2 : vector<1x128xf32> to vector<16x128xf32>
    %5 = arith.addf %3, %4 : vector<16x128xf32>
    %cst_5 = arith.constant 0.000000e+00 : f32
    %6 = vector.broadcast %cst_5 : f32 to vector<16x128xf32>
    %7 = arith.maximumf %5, %6 : vector<16x128xf32>
    %c0_6 = arith.constant 0 : index
    %c0_7 = arith.constant 0 : index
    %8 = vector.load %arg4[%c0_6, %c0_7] : memref<128x128xf32, #tpu.memory_space<vmem>>, vector<128x128xf32>
    %c0_8 = arith.constant 0 : index
    %c0_9 = arith.constant 0 : index
    %9 = vector.load %arg5[%c0_8, %c0_9] : memref<1x128xf32, #tpu.memory_space<vmem>>, vector<1x128xf32>
    %cst_10 = arith.constant dense<0.000000e+00> : vector<16x128xf32>
    %10 = tpu.matmul %7, %8, %cst_10 {dimension_numbers = #tpu.dot_dimension_numbers<[1], [0], [0], [1], [0, 0, 1, 1], [], []>} : vector<16x128xf32>, vector<128x128xf32>, vector<16x128xf32> -> vector<16x128xf32>
    %11 = vector.broadcast %9 : vector<1x128xf32> to vector<16x128xf32>
    %12 = arith.addf %10, %11 : vector<16x128xf32>
    %cst_11 = arith.constant 0.000000e+00 : f32
    %13 = vector.broadcast %cst_11 : f32 to vector<16x128xf32>
    %14 = arith.maximumf %12, %13 : vector<16x128xf32>
    %c0_12 = arith.constant 0 : index
    %c0_13 = arith.constant 0 : index
    %15 = vector.load %arg6[%c0_12, %c0_13] : memref<128x128xf32, #tpu.memory_space<vmem>>, vector<128x128xf32>
    %c0_14 = arith.constant 0 : index
    %c0_15 = arith.constant 0 : index
    %16 = vector.load %arg7[%c0_14, %c0_15] : memref<1x128xf32, #tpu.memory_space<vmem>>, vector<1x128xf32>
    %cst_16 = arith.constant dense<0.000000e+00> : vector<16x128xf32>
    %17 = tpu.matmul %14, %15, %cst_16 {dimension_numbers = #tpu.dot_dimension_numbers<[1], [0], [0], [1], [0, 0, 1, 1], [], []>} : vector<16x128xf32>, vector<128x128xf32>, vector<16x128xf32> -> vector<16x128xf32>
    %18 = vector.broadcast %16 : vector<1x128xf32> to vector<16x128xf32>
    %19 = arith.addf %17, %18 : vector<16x128xf32>
    %cst_17 = arith.constant 0.000000e+00 : f32
    %20 = vector.broadcast %cst_17 : f32 to vector<16x128xf32>
    %21 = arith.maximumf %19, %20 : vector<16x128xf32>
    %c0_18 = arith.constant 0 : index
    %c0_19 = arith.constant 0 : index
    %22 = vector.load %arg8[%c0_18, %c0_19] : memref<128x128xf32, #tpu.memory_space<vmem>>, vector<128x128xf32>
    %c0_20 = arith.constant 0 : index
    %c0_21 = arith.constant 0 : index
    %23 = vector.load %arg9[%c0_20, %c0_21] : memref<1x128xf32, #tpu.memory_space<vmem>>, vector<1x128xf32>
    %cst_22 = arith.constant dense<0.000000e+00> : vector<16x128xf32>
    %24 = tpu.matmul %21, %22, %cst_22 {dimension_numbers = #tpu.dot_dimension_numbers<[1], [0], [0], [1], [0, 0, 1, 1], [], []>} : vector<16x128xf32>, vector<128x128xf32>, vector<16x128xf32> -> vector<16x128xf32>
    %25 = vector.broadcast %23 : vector<1x128xf32> to vector<16x128xf32>
    %26 = arith.addf %24, %25 : vector<16x128xf32>
    %c0_23 = arith.constant 0 : index
    %c0_24 = arith.constant 0 : index
    %27 = vector.load %arg10[%c0_23, %c0_24] : memref<16x128xf32, #tpu.memory_space<vmem>>, vector<16x128xf32>
    tpu.vector_store %arg10[%c0_23, %c0_24], %26 {strides = array<i32>} : memref<16x128xf32, #tpu.memory_space<vmem>>, vector<16x128xf32>,
    return
  }
  func.func @transform_0(%arg0: i32) -> (i32, i32) {
    %c0_i32 = arith.constant 0 : i32
    %c0_i32_0 = arith.constant 0 : i32
    return %arg0, %c0_i32 : i32, i32
  }
  func.func @transform_1(%arg0: i32) -> (i32, i32) {
    %c0_i32 = arith.constant 0 : i32
    %c0_i32_0 = arith.constant 0 : i32
    %c0_i32_1 = arith.constant 0 : i32
    return %c0_i32, %c0_i32_0 : i32, i32
  }
  func.func @transform_2(%arg0: i32) -> (i32, i32) {
    %c0_i32 = arith.constant 0 : i32
    %c0_i32_0 = arith.constant 0 : i32
    %c0_i32_1 = arith.constant 0 : i32
    return %c0_i32, %c0_i32_0 : i32, i32
  }
  func.func @transform_3(%arg0: i32) -> (i32, i32) {
    %c0_i32 = arith.constant 0 : i32
    %c0_i32_0 = arith.constant 0 : i32
    %c0_i32_1 = arith.constant 0 : i32
    return %c0_i32, %c0_i32_0 : i32, i32
  }
  func.func @transform_4(%arg0: i32) -> (i32, i32) {
    %c0_i32 = arith.constant 0 : i32
    %c0_i32_0 = arith.constant 0 : i32
    %c0_i32_1 = arith.constant 0 : i32
    return %c0_i32, %c0_i32_0 : i32, i32
  }
  func.func @transform_5(%arg0: i32) -> (i32, i32) {
    %c0_i32 = arith.constant 0 : i32
    %c0_i32_0 = arith.constant 0 : i32
    %c0_i32_1 = arith.constant 0 : i32
    return %c0_i32, %c0_i32_0 : i32, i32
  }
  func.func @transform_6(%arg0: i32) -> (i32, i32) {
    %c0_i32 = arith.constant 0 : i32
    %c0_i32_0 = arith.constant 0 : i32
    %c0_i32_1 = arith.constant 0 : i32
    return %c0_i32, %c0_i32_0 : i32, i32
  }
  func.func @transform_7(%arg0: i32) -> (i32, i32) {
    %c0_i32 = arith.constant 0 : i32
    %c0_i32_0 = arith.constant 0 : i32
    %c0_i32_1 = arith.constant 0 : i32
    return %c0_i32, %c0_i32_0 : i32, i32
  }
  func.func @transform_8(%arg0: i32) -> (i32, i32) {
    %c0_i32 = arith.constant 0 : i32
    %c0_i32_0 = arith.constant 0 : i32
    %c0_i32_1 = arith.constant 0 : i32
    return %c0_i32, %c0_i32_0 : i32, i32
  }
  func.func @transform_9(%arg0: i32) -> (i32, i32) {
    %c0_i32 = arith.constant 0 : i32
    %c0_i32_0 = arith.constant 0 : i32
    return %arg0, %c0_i32 : i32, i32
  }
}

</mosaic_0001>

<llo_original>
// kernel: tpu_custom_call.1
$region0: #{tpu_custom_call.1}
  #allocation0 [shape = 'u32[]', space=smem, size = 0x4, offset = 0x4, fixed_abs, tag = 'smem constant byte address 0x4 - core index']
  #allocation1 [shape = 'u32[144,128]{1,0:T(1,128)}', space=vmem, size = 0x12000, scoped, tag = 'internal scratch']
  %s0 = inlined_call_operand.hbm [shape: f32[48,128], index: 0, kind: input, shape index: {}]
  %s1 = inlined_call_operand.hbm [shape: f32[128,128], index: 1, kind: input, shape index: {}]
  %s2 = inlined_call_operand.vmem [shape: f32[1,128], index: 2, kind: input, shape index: {}]
  %s3 = inlined_call_operand.hbm [shape: f32[128,128], index: 3, kind: input, shape index: {}]
  %s4 = inlined_call_operand.vmem [shape: f32[1,128], index: 4, kind: input, shape index: {}]
  %s5 = inlined_call_operand.hbm [shape: f32[128,128], index: 5, kind: input, shape index: {}]
  %s6 = inlined_call_operand.vmem [shape: f32[1,128], index: 6, kind: input, shape index: {}]
  %s7 = inlined_call_operand.hbm [shape: f32[128,128], index: 7, kind: input, shape index: {}]
  %s8 = inlined_call_operand.vmem [shape: f32[1,128], index: 8, kind: input, shape index: {}]
  %s9 = inlined_call_operand.hbm [shape: f32[48,128], index: 9, kind: output, shape index: {}]
  %s10 = sld [smem:[#allocation0]]
  $region89: #{tpu_custom_call.1} parent=0
    _
  %s12 = ssub.s32 1, %s10
  %s13 = scalar_select 0, %s12, %s10
  $region1: #{tpu_custom_call.1} parent=0
    #allocation2 [shape = 'u8[16384]{0}', space=vmem, size = 0x4000, scoped, tag = 'input window, operand 0']
    #allocation3 [shape = 's32[2]{0}', space=sflag, size = 0x8, scoped, tag = 'scoped memory for tpu_custom_call.1']
    #allocation4 [shape = 's32[2]{0}', space=sflag, size = 0x8, scoped, tag = 'scoped memory for tpu_custom_call.1']
    #allocation5 [shape = 'u8[65536]{0}', space=vmem, size = 0x10000, scoped, tag = 'input window, operand 1, single buffered']
    #allocation6 [shape = 's32[1]{0}', space=sflag, size = 0x4, scoped, tag = 'scoped memory for tpu_custom_call.1']
    #allocation7 [shape = 'u8[65536]{0}', space=vmem, size = 0x10000, scoped, tag = 'input window, operand 3, single buffered']
    #allocation8 [shape = 'u8[65536]{0}', space=vmem, size = 0x10000, scoped, tag = 'input window, operand 5, single buffered']
    #allocation9 [shape = 's32[1]{0}', space=sflag, size = 0x4, scoped, tag = 'scoped memory for tpu_custom_call.1']
    #allocation10 [shape = 'u8[65536]{0}', space=vmem, size = 0x10000, scoped, tag = 'input window, operand 7, single buffered']
    #allocation11 [shape = 'u8[16384]{0}', space=vmem, size = 0x4000, scoped, tag = 'output window, operand 0']
    %14 = vsyncpa [#allocation3], 0
    %s15 = scalar_lea.sflag [#allocation3], 1
    %16 = vsyncpa %s15, 0
    %17 = vsyncpa [#allocation6], 0
    %18 = vsyncpa [#allocation9], 0
    %19 = vsyncpa [#allocation4], 0
    %s20 = scalar_lea.sflag [#allocation4], 1
    %21 = vsyncpa %s20, 0
    loop: start=0, step=1, limit=5
    $region2: #{tpu_custom_call.1} parent=1 // loop_pre_header
      _
    $region3: #{tpu_custom_call.1} parent=1 // loop_header
      %s23 = sphi 0, %s27
      %p24 = scmp.ge.s32.totalorder %s23, 5
      %s33 = sphi 0, %s35
      %s36 = sphi 0, %s33
      %s37 = sphi 0, %s36
      %s53 = sphi 0, %s37
      %s57 = sphi 0, %s57
      %s59 = sphi 0, %s57
      %s60 = sphi 0, %s59
      %s74 = sphi 0, %s60
      %s78 = sphi 0, %s78
      %s80 = sphi 0, %s78
      %s81 = sphi 0, %s80
      %s95 = sphi 0, %s81
      %s99 = sphi 0, %s99
      %s101 = sphi 0, %s99
      %s102 = sphi 0, %s101
      %s116 = sphi 0, %s102
      %s120 = sphi 0, %s120
      %s122 = sphi 0, %s120
      %s123 = sphi 0, %s122
      %s137 = sphi 0, %s123
      %s141 = sphi 0, %s141
      %s143 = sphi 0, %s141
      %s144 = sphi 0, %s143
      %s158 = sphi 0, %s144
      %s162 = sphi 0, %s162
      %s164 = sphi 0, %s162
      %s165 = sphi 0, %s164
      %s179 = sphi 0, %s165
      %s183 = sphi 0, %s183
      %s185 = sphi 0, %s183
      %s186 = sphi 0, %s185
      %s200 = sphi 0, %s186
      %s204 = sphi 0, %s204
      %s206 = sphi 0, %s204
      %s207 = sphi 0, %s206
      %s221 = sphi 0, %s207
      %s227 = sphi 0, %s229
      %s230 = sphi 0, %s227
      %s231 = sphi 0, %s230
      %s247 = sphi 0, %s231
    $region4: #{tpu_custom_call.1} parent=1 // loop_header_branch
      %26 = sbr.rel (%p24) target = $region8
    $region5: #{tpu_custom_call.1} parent=1 // loop_body
      %s28 = ssub.s32 %s23, 1
      %s29 = ssub.s32 %s23, 2
      %s30 = sadd.s32 %s23, 1
      %s31 = ssub.s32 %s23, %s30
      %p32 = scmp.eq.s32.totalorder %s31, 0
      %s34 = sadd.s32 %s33, 1
      %s35 = scalar_select %p32, %s33, %s34
      %p38 = pneg %p32
      %p39 = scmp.eq.s32.totalorder %s23, 2
      %p40 = por %p38, %p39
      %p41 = scmp.ne.s32.totalorder %s33, %s36
      %p42 = scmp.eq.s32.totalorder %s23, 0
      %p43 = por %p41, %p42
      %p44 = scmp.ne.s32.totalorder %s33, %s36
      %p45 = scmp.eq.s32.totalorder %s28, 2
      %p46 = por %p44, %p45
      %p47 = scmp.ne.s32.totalorder %s36, %s37
      %p48 = scmp.eq.s32.totalorder %s28, 0
      %p49 = por %p47, %p48
      %p50 = scmp.ne.s32.totalorder %s36, %s37
      %p51 = scmp.eq.s32.totalorder %s29, 2
      %p52 = por %p50, %p51
      %p54 = scmp.ne.s32.totalorder %s37, %s53
      %p55 = scmp.eq.s32.totalorder %s29, 0
      %p56 = por %p54, %p55
      %s58 = sadd.s32 %s57, 1
      %p61 = scmp.eq.s32.totalorder %s23, 2
      %p62 = scmp.ne.s32.totalorder %s57, %s59
      %p63 = scmp.eq.s32.totalorder %s23, 0
      %p64 = por %p62, %p63
      %p65 = scmp.ne.s32.totalorder %s57, %s59
      %p66 = scmp.eq.s32.totalorder %s28, 2
      %p67 = por %p65, %p66
      %p68 = scmp.ne.s32.totalorder %s59, %s60
      %p69 = scmp.eq.s32.totalorder %s28, 0
      %p70 = por %p68, %p69
      %p71 = scmp.ne.s32.totalorder %s59, %s60
      %p72 = scmp.eq.s32.totalorder %s29, 2
      %p73 = por %p71, %p72
      %p75 = scmp.ne.s32.totalorder %s60, %s74
      %p76 = scmp.eq.s32.totalorder %s29, 0
      %p77 = por %p75, %p76
      %s79 = sadd.s32 %s78, 1
      %p82 = scmp.eq.s32.totalorder %s23, 2
      %p83 = scmp.ne.s32.totalorder %s78, %s80
      %p84 = scmp.eq.s32.totalorder %s23, 0
      %p85 = por %p83, %p84
      %p86 = scmp.ne.s32.totalorder %s78, %s80
      %p87 = scmp.eq.s32.totalorder %s28, 2
      %p88 = por %p86, %p87
      %p89 = scmp.ne.s32.totalorder %s80, %s81
      %p90 = scmp.eq.s32.totalorder %s28, 0
      %p91 = por %p89, %p90
      %p92 = scmp.ne.s32.totalorder %s80, %s81
      %p93 = scmp.eq.s32.totalorder %s29, 2
      %p94 = por %p92, %p93
      %p96 = scmp.ne.s32.totalorder %s81, %s95
      %p97 = scmp.eq.s32.totalorder %s29, 0
      %p98 = por %p96, %p97
      %s100 = sadd.s32 %s99, 1
      %p103 = scmp.eq.s32.totalorder %s23, 2
      %p104 = scmp.ne.s32.totalorder %s99, %s101
      %p105 = scmp.eq.s32.totalorder %s23, 0
      %p106 = por %p104, %p105
      %p107 = scmp.ne.s32.totalorder %s99, %s101
      %p108 = scmp.eq.s32.totalorder %s28, 2
      %p109 = por %p107, %p108
      %p110 = scmp.ne.s32.totalorder %s101, %s102
      %p111 = scmp.eq.s32.totalorder %s28, 0
      %p112 = por %p110, %p111
      %p113 = scmp.ne.s32.totalorder %s101, %s102
      %p114 = scmp.eq.s32.totalorder %s29, 2
      %p115 = por %p113, %p114
      %p117 = scmp.ne.s32.totalorder %s102, %s116
      %p118 = scmp.eq.s32.totalorder %s29, 0
      %p119 = por %p117, %p118
      %s121 = sadd.s32 %s120, 1
      %p124 = scmp.eq.s32.totalorder %s23, 2
      %p125 = scmp.ne.s32.totalorder %s120, %s122
      %p126 = scmp.eq.s32.totalorder %s23, 0
      %p127 = por %p125, %p126
      %p128 = scmp.ne.s32.totalorder %s120, %s122
      %p129 = scmp.eq.s32.totalorder %s28, 2
      %p130 = por %p128, %p129
      %p131 = scmp.ne.s32.totalorder %s122, %s123
      %p132 = scmp.eq.s32.totalorder %s28, 0
      %p133 = por %p131, %p132
      %p134 = scmp.ne.s32.totalorder %s122, %s123
      %p135 = scmp.eq.s32.totalorder %s29, 2
      %p136 = por %p134, %p135
      %p138 = scmp.ne.s32.totalorder %s123, %s137
      %p139 = scmp.eq.s32.totalorder %s29, 0
      %p140 = por %p138, %p139
      %s142 = sadd.s32 %s141, 1
      %p145 = scmp.eq.s32.totalorder %s23, 2
      %p146 = scmp.ne.s32.totalorder %s141, %s143
      %p147 = scmp.eq.s32.totalorder %s23, 0
      %p148 = por %p146, %p147
      %p149 = scmp.ne.s32.totalorder %s141, %s143
      %p150 = scmp.eq.s32.totalorder %s28, 2
      %p151 = por %p149, %p150
      %p152 = scmp.ne.s32.totalorder %s143, %s144
      %p153 = scmp.eq.s32.totalorder %s28, 0
      %p154 = por %p152, %p153
      %p155 = scmp.ne.s32.totalorder %s143, %s144
      %p156 = scmp.eq.s32.totalorder %s29, 2
      %p157 = por %p155, %p156
      %p159 = scmp.ne.s32.totalorder %s144, %s158
      %p160 = scmp.eq.s32.totalorder %s29, 0
      %p161 = por %p159, %p160
      %s163 = sadd.s32 %s162, 1
      %p166 = scmp.eq.s32.totalorder %s23, 2
      %p167 = scmp.ne.s32.totalorder %s162, %s164
      %p168 = scmp.eq.s32.totalorder %s23, 0
      %p169 = por %p167, %p168
      %p170 = scmp.ne.s32.totalorder %s162, %s164
      %p171 = scmp.eq.s32.totalorder %s28, 2
      %p172 = por %p170, %p171
      %p173 = scmp.ne.s32.totalorder %s164, %s165
      %p174 = scmp.eq.s32.totalorder %s28, 0
      %p175 = por %p173, %p174
      %p176 = scmp.ne.s32.totalorder %s164, %s165
      %p177 = scmp.eq.s32.totalorder %s29, 2
      %p178 = por %p176, %p177
      %p180 = scmp.ne.s32.totalorder %s165, %s179
      %p181 = scmp.eq.s32.totalorder %s29, 0
      %p182 = por %p180, %p181
      %s184 = sadd.s32 %s183, 1
      %p187 = scmp.eq.s32.totalorder %s23, 2
      %p188 = scmp.ne.s32.totalorder %s183, %s185
      %p189 = scmp.eq.s32.totalorder %s23, 0
      %p190 = por %p188, %p189
      %p191 = scmp.ne.s32.totalorder %s183, %s185
      %p192 = scmp.eq.s32.totalorder %s28, 2
      %p193 = por %p191, %p192
      %p194 = scmp.ne.s32.totalorder %s185, %s186
      %p195 = scmp.eq.s32.totalorder %s28, 0
      %p196 = por %p194, %p195
      %p197 = scmp.ne.s32.totalorder %s185, %s186
      %p198 = scmp.eq.s32.totalorder %s29, 2
      %p199 = por %p197, %p198
      %p201 = scmp.ne.s32.totalorder %s186, %s200
      %p202 = scmp.eq.s32.totalorder %s29, 0
      %p203 = por %p201, %p202
      %s205 = sadd.s32 %s204, 1
      %p208 = scmp.eq.s32.totalorder %s23, 2
      %p209 = scmp.ne.s32.totalorder %s204, %s206
      %p210 = scmp.eq.s32.totalorder %s23, 0
      %p211 = por %p209, %p210
      %p212 = scmp.ne.s32.totalorder %s204, %s206
      %p213 = scmp.eq.s32.totalorder %s28, 2
      %p214 = por %p212, %p213
      %p215 = scmp.ne.s32.totalorder %s206, %s207
      %p216 = scmp.eq.s32.totalorder %s28, 0
      %p217 = por %p215, %p216
      %p218 = scmp.ne.s32.totalorder %s206, %s207
      %p219 = scmp.eq.s32.totalorder %s29, 2
      %p220 = por %p218, %p219
      %p222 = scmp.ne.s32.totalorder %s207, %s221
      %p223 = scmp.eq.s32.totalorder %s29, 0
      %p224 = por %p222, %p223
      %s225 = ssub.s32 %s23, %s30
      %p226 = scmp.eq.s32.totalorder %s225, 0
      %s228 = sadd.s32 %s227, 1
      %s229 = scalar_select %p226, %s227, %s228
      %p232 = pneg %p226
      %p233 = scmp.eq.s32.totalorder %s23, 2
      %p234 = por %p232, %p233
      %p235 = scmp.ne.s32.totalorder %s227, %s230
      %p236 = scmp.eq.s32.totalorder %s23, 0
      %p237 = por %p235, %p236
      %p238 = scmp.ne.s32.totalorder %s227, %s230
      %p239 = scmp.eq.s32.totalorder %s28, 2
      %p240 = por %p238, %p239
      %p241 = scmp.ne.s32.totalorder %s230, %s231
      %p242 = scmp.eq.s32.totalorder %s28, 0
      %p243 = por %p241, %p242
      %p244 = scmp.ne.s32.totalorder %s230, %s231
      %p245 = scmp.eq.s32.totalorder %s29, 2
      %p246 = por %p244, %p245
      %p248 = scmp.ne.s32.totalorder %s231, %s247
      %p249 = scmp.eq.s32.totalorder %s29, 0
      %p250 = por %p248, %p249
      %p251 = scmp.le.s32.totalorder 1, %s23
      %p252 = scmp.lt.s32.totalorder %s23, 4
      %p253 = pnand %p251, %p252
      %p254 = pneg %p253
      // Predicated region
      $region9: #{tpu_custom_call.1} parent=5 // pred_check
        _
      $region10: #{tpu_custom_call.1} parent=5 // pred_check_branch
        %256 = sbr.rel (%p253) target = $region12
      $region11: #{tpu_custom_call.1} parent=5 // pred_region
        %s257 = ssub.s32 %s23, 1
        // Predicated region
        $region13: #{tpu_custom_call.1} parent=11 // pred_check
          %p258 = pneg %p70
        $region14: #{tpu_custom_call.1} parent=11 // pred_check_branch
          %260 = sbr.rel (%p258) target = $region16
        $region15: #{tpu_custom_call.1} parent=11 // pred_region
          %s262 = ssub.s32 2048, 2048
          %263 = vsyncadd [#allocation6], %s262
          %s264 = sshll.u32 [#allocation5], 4
          %s265 = int_to_ptr.vmem [resolvable:$true] %s264
          %270 = dma.hbm_to_vmem [thread:$0]  %s1, 2048, %s265, [#allocation6], 128, 128, 8
        $region16: #{tpu_custom_call.1} parent=11 // pred_fallthru
          _
        // Predicated region
        $region17: #{tpu_custom_call.1} parent=11 // pred_check
          %p271 = pneg %p91
        $region18: #{tpu_custom_call.1} parent=11 // pred_check_branch
          %273 = sbr.rel (%p271) target = $region20
        $region19: #{tpu_custom_call.1} parent=11 // pred_region
          _
        $region20: #{tpu_custom_call.1} parent=11 // pred_fallthru
          _
        // Predicated region
        $region21: #{tpu_custom_call.1} parent=11 // pred_check
          %p274 = pneg %p112
        $region22: #{tpu_custom_call.1} parent=11 // pred_check_branch
          %276 = sbr.rel (%p274) target = $region24
        $region23: #{tpu_custom_call.1} parent=11 // pred_region
          %s278 = ssub.s32 2048, 2048
          %279 = vsyncadd [#allocation6], %s278
          %s280 = sshll.u32 [#allocation7], 4
          %s281 = int_to_ptr.vmem [resolvable:$true] %s280
          %286 = dma.hbm_to_vmem [thread:$0]  %s3, 2048, %s281, [#allocation6], 128, 128, 8
        $region24: #{tpu_custom_call.1} parent=11 // pred_fallthru
          _
        // Predicated region
        $region25: #{tpu_custom_call.1} parent=11 // pred_check
          %p287 = pneg %p133
        $region26: #{tpu_custom_call.1} parent=11 // pred_check_branch
          %289 = sbr.rel (%p287) target = $region28
        $region27: #{tpu_custom_call.1} parent=11 // pred_region
          _
        $region28: #{tpu_custom_call.1} parent=11 // pred_fallthru
          _
        // Predicated region
        $region29: #{tpu_custom_call.1} parent=11 // pred_check
          %p290 = pneg %p154
        $region30: #{tpu_custom_call.1} parent=11 // pred_check_branch
          %292 = sbr.rel (%p290) target = $region32
        $region31: #{tpu_custom_call.1} parent=11 // pred_region
          %s294 = ssub.s32 2048, 2048
          %295 = vsyncadd [#allocation9], %s294
          %s296 = sshll.u32 [#allocation8], 4
          %s297 = int_to_ptr.vmem [resolvable:$true] %s296
          %302 = dma.hbm_to_vmem [thread:$0]  %s5, 2048, %s297, [#allocation9], 128, 128, 8
        $region32: #{tpu_custom_call.1} parent=11 // pred_fallthru
          _
        // Predicated region
        $region33: #{tpu_custom_call.1} parent=11 // pred_check
          %p303 = pneg %p175
        $region34: #{tpu_custom_call.1} parent=11 // pred_check_branch
          %305 = sbr.rel (%p303) target = $region36
        $region35: #{tpu_custom_call.1} parent=11 // pred_region
          _
        $region36: #{tpu_custom_call.1} parent=11 // pred_fallthru
          _
        // Predicated region
        $region37: #{tpu_custom_call.1} parent=11 // pred_check
          %p306 = pneg %p196
        $region38: #{tpu_custom_call.1} parent=11 // pred_check_branch
          %308 = sbr.rel (%p306) target = $region40
        $region39: #{tpu_custom_call.1} parent=11 // pred_region
          %s310 = ssub.s32 2048, 2048
          %311 = vsyncadd [#allocation9], %s310
          %s312 = sshll.u32 [#allocation10], 4
          %s313 = int_to_ptr.vmem [resolvable:$true] %s312
          %318 = dma.hbm_to_vmem [thread:$0]  %s7, 2048, %s313, [#allocation9], 128, 128, 8
        $region40: #{tpu_custom_call.1} parent=11 // pred_fallthru
          _
        // Predicated region
        $region41: #{tpu_custom_call.1} parent=11 // pred_check
          %p319 = pneg %p217
        $region42: #{tpu_custom_call.1} parent=11 // pred_check_branch
          %321 = sbr.rel (%p319) target = $region44
        $region43: #{tpu_custom_call.1} parent=11 // pred_region
          _
        $region44: #{tpu_custom_call.1} parent=11 // pred_fallthru
          _
      $region12: #{tpu_custom_call.1} parent=5 // pred_fallthru
        _
      %p322 = scmp.lt.s32.totalorder %s23, 3
      // Predicated region
      $region45: #{tpu_custom_call.1} parent=5 // pred_check
        %p323 = pneg %p322
      $region46: #{tpu_custom_call.1} parent=5 // pred_check_branch
        %325 = sbr.rel (%p323) target = $region48
      $region47: #{tpu_custom_call.1} parent=5 // pred_region
        // Predicated region
        $region49: #{tpu_custom_call.1} parent=47 // pred_check
          %p326 = pneg %p43
        $region50: #{tpu_custom_call.1} parent=47 // pred_check_branch
          %328 = sbr.rel (%p326) target = $region52
        $region51: #{tpu_custom_call.1} parent=47 // pred_region
          %s329 = sand.u32 %s33, 1
          %s330 = scalar_lea.sflag [#allocation3], %s329
          %s331 = sand.u32 %s33, 1
          %s332 = smul.addr %s331, 16
          %s333 = scalar_lea.vmem [#allocation2], %s332
          %s334 = smul.u32 2, %s23
          %s336 = ssub.s32 256, 256
          %337 = vsyncadd %s330, %s336
          %s338 = smul.addr %s334, 128
          %s339 = scalar_lea.hbm %s0, %s338
          %s340 = sshll.u32 %s333, 4
          %s341 = int_to_ptr.vmem [resolvable:$true] %s340
          %346 = dma.hbm_to_vmem [thread:$0]  %s339, 256, %s341, %s330, 128, 128, 8
        $region52: #{tpu_custom_call.1} parent=47 // pred_fallthru
          _
      $region48: #{tpu_custom_call.1} parent=5 // pred_fallthru
        _
      %p347 = scmp.le.s32.totalorder 1, %s23
      %p348 = scmp.lt.s32.totalorder %s23, 4
      %p349 = pnand %p347, %p348
      %p350 = pneg %p349
      // Predicated region
      $region53: #{tpu_custom_call.1} parent=5 // pred_check
        _
      $region54: #{tpu_custom_call.1} parent=5 // pred_check_branch
        %352 = sbr.rel (%p349) target = $region56
      $region55: #{tpu_custom_call.1} parent=5 // pred_region
        %s353 = ssub.s32 %s23, 1
        %s354 = sand.u32 %s36, 1
        %s355 = scalar_lea.sflag [#allocation3], %s354
        %s356 = sand.u32 %s36, 1
        %s357 = smul.addr %s356, 16
        %s358 = scalar_lea.vmem [#allocation2], %s357
        // Predicated region
        $region57: #{tpu_custom_call.1} parent=55 // pred_check
          %p359 = pneg %p49
        $region58: #{tpu_custom_call.1} parent=55 // pred_check_branch
          %361 = sbr.rel (%p359) target = $region60
        $region59: #{tpu_custom_call.1} parent=55 // pred_region
          %362 = dma.done %s355, 256
        $region60: #{tpu_custom_call.1} parent=55 // pred_fallthru
          _
        // Predicated region
        $region61: #{tpu_custom_call.1} parent=55 // pred_check
          %p363 = pneg %p70
        $region62: #{tpu_custom_call.1} parent=55 // pred_check_branch
          %365 = sbr.rel (%p363) target = $region64
        $region63: #{tpu_custom_call.1} parent=55 // pred_region
          %366 = dma.done [#allocation6], 2048
        $region64: #{tpu_custom_call.1} parent=55 // pred_fallthru
          _
        // Predicated region
        $region65: #{tpu_custom_call.1} parent=55 // pred_check
          %p367 = pneg %p112
        $region66: #{tpu_custom_call.1} parent=55 // pred_check_branch
          %369 = sbr.rel (%p367) target = $region68
        $region67: #{tpu_custom_call.1} parent=55 // pred_region
          %370 = dma.done [#allocation6], 2048
        $region68: #{tpu_custom_call.1} parent=55 // pred_fallthru
          _
        // Predicated region
        $region69: #{tpu_custom_call.1} parent=55 // pred_check
          %p371 = pneg %p154
        $region70: #{tpu_custom_call.1} parent=55 // pred_check_branch
          %373 = sbr.rel (%p371) target = $region72
        $region71: #{tpu_custom_call.1} parent=55 // pred_region
          %374 = dma.done [#allocation9], 2048
        $region72: #{tpu_custom_call.1} parent=55 // pred_fallthru
          _
        // Predicated region
        $region73: #{tpu_custom_call.1} parent=55 // pred_check
          %p375 = pneg %p196
        $region74: #{tpu_custom_call.1} parent=55 // pred_check_branch
          %377 = sbr.rel (%p375) target = $region76
        $region75: #{tpu_custom_call.1} parent=55 // pred_region
          %378 = dma.done [#allocation9], 2048
        $region76: #{tpu_custom_call.1} parent=55 // pred_fallthru
          _
        %s379 = sand.u32 %s36, 1
        %s380 = scalar_lea.sflag [#allocation3], %s379
        %s381 = sand.u32 %s36, 1
        %s382 = smul.addr %s381, 16
        %s383 = scalar_lea.vmem [#allocation2], %s382
        %p384 = pneg %p49
        %p385 = pneg %p46
        %p386 = pneg %p70
        %p387 = pneg %p67
        %p388 = pneg %p91
        %p389 = pneg %p88
        %p390 = pneg %p112
        %p391 = pneg %p109
        %p392 = pneg %p133
        %p393 = pneg %p130
        %p394 = pneg %p154
        %p395 = pneg %p151
        %p396 = pneg %p175
        %p397 = pneg %p172
        %p398 = pneg %p196
        %p399 = pneg %p193
        %p400 = pneg %p217
        %p401 = pneg %p214
        %p402 = pneg %p243
        %p403 = pneg %p240
        %s404 = sand.u32 %s230, 1
        %s405 = scalar_lea.sflag [#allocation4], %s404
        %s406 = sand.u32 %s230, 1
        %s407 = smul.addr %s406, 16
        %s408 = scalar_lea.vmem [#allocation11], %s407
        %s409 = smul.u32 2, %s28
        %s410 = smul.u32 2, %s28
        %v411 = vld [vmem:[%s358] sm:$0xff]
        %v412 = vld [vmem:[%s358 + $0x8] sm:$0xff]
        %v413 = vld [vmem:[#allocation5] sm:$0xff]
        %v414 = vld [vmem:[#allocation5 + $0x8] sm:$0xff]
        %v415 = vld [vmem:[#allocation5 + $0x10] sm:$0xff]
        %v416 = vld [vmem:[#allocation5 + $0x18] sm:$0xff]
        %v417 = vld [vmem:[#allocation5 + $0x20] sm:$0xff]
        %v418 = vld [vmem:[#allocation5 + $0x28] sm:$0xff]
        %v419 = vld [vmem:[#allocation5 + $0x30] sm:$0xff]
        %v420 = vld [vmem:[#allocation5 + $0x38] sm:$0xff]
        %v421 = vld [vmem:[#allocation5 + $0x40] sm:$0xff]
        %v422 = vld [vmem:[#allocation5 + $0x48] sm:$0xff]
        %v423 = vld [vmem:[#allocation5 + $0x50] sm:$0xff]
        %v424 = vld [vmem:[#allocation5 + $0x58] sm:$0xff]
        %v425 = vld [vmem:[#allocation5 + $0x60] sm:$0xff]
        %v426 = vld [vmem:[#allocation5 + $0x68] sm:$0xff]
        %v427 = vld [vmem:[#allocation5 + $0x70] sm:$0xff]
        %v428 = vld [vmem:[#allocation5 + $0x78] sm:$0xff]
        %v429 = vld [vmem:[%s2] sm:$0x1]
        %v431 = vlaneseq
        %v432 = vshrl.u32 %v431, 7
        %v433 = vsub.s32 0, %v432
        %v434 = vrot.slane %v429, %v433
        %436 = vmatprep.subr.mxu0 0.0
        %437 = vmatpush1.msra.mxu0 %v413
        %438 = vmatprep.subr.mxu0 0.0
        %439 = vmatpush1.msra.mxu0 %v414
        %440 = vmatprep.subr.mxu0 0.0
        %441 = vmatpush1.msra.mxu0 %v415
        %442 = vmatprep.subr.mxu0 0.0
        %443 = vmatpush1.msra.mxu0 %v416
        %444 = vmatprep.subr.mxu0 0.0
        %445 = vmatpush1.msra.mxu0 %v417
        %446 = vmatprep.subr.mxu0 0.0
        %447 = vmatpush1.msra.mxu0 %v418
        %448 = vmatprep.subr.mxu0 0.0
        %449 = vmatpush1.msra.mxu0 %v419
        %450 = vmatprep.subr.mxu0 0.0
        %451 = vmatpush1.msra.mxu0 %v420
        %452 = vmatprep.subr.mxu0 0.0
        %453 = vmatpush1.msra.mxu0 %v421
        %454 = vmatprep.subr.mxu0 0.0
        %455 = vmatpush1.msra.mxu0 %v422
        %456 = vmatprep.subr.mxu0 0.0
        %457 = vmatpush1.msra.mxu0 %v423
        %458 = vmatprep.subr.mxu0 0.0
        %459 = vmatpush1.msra.mxu0 %v424
        %460 = vmatprep.subr.mxu0 0.0
        %461 = vmatpush1.msra.mxu0 %v425
        %462 = vmatprep.subr.mxu0 0.0
        %463 = vmatpush1.msra.mxu0 %v426
        %464 = vmatprep.subr.mxu0 0.0
        %465 = vmatpush1.msra.mxu0 %v427
        %466 = vmatprep.subr.mxu0 0.0
        %467 = vmatpush1.msra.mxu0 %v428
        %468 = vmatprep.subr.mxu0 0.0
        %469 = vmatpush1.msra.mxu0 0.0
        %470 = vmatprep.subr.mxu0 0.0
        %471 = vmatpush1.msra.mxu0 0.0
        %472 = vmatprep.subr.mxu0 0.0
        %473 = vmatpush1.msra.mxu0 0.0
        %474 = vmatprep.subr.mxu0 0.0
        %475 = vmatpush1.msra.mxu0 0.0
        %476 = vmatprep.subr.mxu0 0.0
        %477 = vmatpush1.msra.mxu0 0.0
        %478 = vmatprep.subr.mxu0 0.0
        %479 = vmatpush1.msra.mxu0 0.0
        %480 = vmatprep.subr.mxu0 0.0
        %481 = vmatpush1.msra.mxu0 0.0
        %482 = vmatprep.subr.mxu0 0.0
        %483 = vmatpush1.msra.mxu0 0.0
        %484 = vmatprep.subr.mxu0 0.0
        %485 = vmatpush1.msra.mxu0 0.0
        %486 = vmatprep.subr.mxu0 0.0
        %487 = vmatpush1.msra.mxu0 0.0
        %488 = vmatprep.subr.mxu0 0.0
        %489 = vmatpush1.msra.mxu0 0.0
        %490 = vmatprep.subr.mxu0 0.0
        %491 = vmatpush1.msra.mxu0 0.0
        %492 = vmatprep.subr.mxu0 0.0
        %493 = vmatpush1.msra.mxu0 0.0
        %494 = vmatprep.subr.mxu0 0.0
        %495 = vmatpush1.msra.mxu0 0.0
        %496 = vmatprep.subr.mxu0 0.0
        %497 = vmatpush1.msra.mxu0 0.0
        %498 = vmatprep.subr.mxu0 0.0
        %499 = vmatpush1.msra.mxu0 0.0
        %500 = vmatprep.mubr.f32.mxu0 0.0
        %501 = vmatmul.mubr.f32.gmra.mrb[0].mxu0 %v411
        %v502 = vpop.f32.mrb[0].mxu0
        %v503 = vadd.f32 %v434, %v502
        %v504 = vpop.f32.mrb[0].mxu0
        %505 = vmatprep.mubr.f32.mxu0 0.0
        %506 = vmatmul.mubr.f32.gmra.mrb[0].mxu0 %v412
        %v507 = vpop.f32.mrb[0].mxu0
        %v508 = vadd.f32 %v434, %v507
        %v509 = vpop.f32.mrb[0].mxu0
        %510 = vdwg.mxu0
        %v511 = vmax.f32 %v503, 0.0
        %v512 = vmax.f32 %v508, 0.0
        %v513 = vld [vmem:[#allocation7] sm:$0xff]
        %v514 = vld [vmem:[#allocation7 + $0x8] sm:$0xff]
        %v515 = vld [vmem:[#allocation7 + $0x10] sm:$0xff]
        %v516 = vld [vmem:[#allocation7 + $0x18] sm:$0xff]
        %v517 = vld [vmem:[#allocation7 + $0x20] sm:$0xff]
        %v518 = vld [vmem:[#allocation7 + $0x28] sm:$0xff]
        %v519 = vld [vmem:[#allocation7 + $0x30] sm:$0xff]
        %v520 = vld [vmem:[#allocation7 + $0x38] sm:$0xff]
        %v521 = vld [vmem:[#allocation7 + $0x40] sm:$0xff]
        %v522 = vld [vmem:[#allocation7 + $0x48] sm:$0xff]
        %v523 = vld [vmem:[#allocation7 + $0x50] sm:$0xff]
        %v524 = vld [vmem:[#allocation7 + $0x58] sm:$0xff]
        %v525 = vld [vmem:[#allocation7 + $0x60] sm:$0xff]
        %v526 = vld [vmem:[#allocation7 + $0x68] sm:$0xff]
        %v527 = vld [vmem:[#allocation7 + $0x70] sm:$0xff]
        %v528 = vld [vmem:[#allocation7 + $0x78] sm:$0xff]
        %v529 = vld [vmem:[%s4] sm:$0x1]
        %v531 = vlaneseq
        %v532 = vshrl.u32 %v531, 7
        %v533 = vsub.s32 0, %v532
        %v534 = vrot.slane %v529, %v533
        %536 = vmatprep.subr.mxu0 0.0
        %537 = vmatpush1.msra.mxu0 %v513
        %538 = vmatprep.subr.mxu0 0.0
        %539 = vmatpush1.msra.mxu0 %v514
        %540 = vmatprep.subr.mxu0 0.0
        %541 = vmatpush1.msra.mxu0 %v515
        %542 = vmatprep.subr.mxu0 0.0
        %543 = vmatpush1.msra.mxu0 %v516
        %544 = vmatprep.subr.mxu0 0.0
        %545 = vmatpush1.msra.mxu0 %v517
        %546 = vmatprep.subr.mxu0 0.0
        %547 = vmatpush1.msra.mxu0 %v518
        %548 = vmatprep.subr.mxu0 0.0
        %549 = vmatpush1.msra.mxu0 %v519
        %550 = vmatprep.subr.mxu0 0.0
        %551 = vmatpush1.msra.mxu0 %v520
        %552 = vmatprep.subr.mxu0 0.0
        %553 = vmatpush1.msra.mxu0 %v521
        %554 = vmatprep.subr.mxu0 0.0
        %555 = vmatpush1.msra.mxu0 %v522
        %556 = vmatprep.subr.mxu0 0.0
        %557 = vmatpush1.msra.mxu0 %v523
        %558 = vmatprep.subr.mxu0 0.0
        %559 = vmatpush1.msra.mxu0 %v524
        %560 = vmatprep.subr.mxu0 0.0
        %561 = vmatpush1.msra.mxu0 %v525
        %562 = vmatprep.subr.mxu0 0.0
        %563 = vmatpush1.msra.mxu0 %v526
        %564 = vmatprep.subr.mxu0 0.0
        %565 = vmatpush1.msra.mxu0 %v527
        %566 = vmatprep.subr.mxu0 0.0
        %567 = vmatpush1.msra.mxu0 %v528
        %568 = vmatprep.subr.mxu0 0.0
        %569 = vmatpush1.msra.mxu0 0.0
        %570 = vmatprep.subr.mxu0 0.0
        %571 = vmatpush1.msra.mxu0 0.0
        %572 = vmatprep.subr.mxu0 0.0
        %573 = vmatpush1.msra.mxu0 0.0
        %574 = vmatprep.subr.mxu0 0.0
        %575 = vmatpush1.msra.mxu0 0.0
        %576 = vmatprep.subr.mxu0 0.0
        %577 = vmatpush1.msra.mxu0 0.0
        %578 = vmatprep.subr.mxu0 0.0
        %579 = vmatpush1.msra.mxu0 0.0
        %580 = vmatprep.subr.mxu0 0.0
        %581 = vmatpush1.msra.mxu0 0.0
        %582 = vmatprep.subr.mxu0 0.0
        %583 = vmatpush1.msra.mxu0 0.0
        %584 = vmatprep.subr.mxu0 0.0
        %585 = vmatpush1.msra.mxu0 0.0
        %586 = vmatprep.subr.mxu0 0.0
        %587 = vmatpush1.msra.mxu0 0.0
        %588 = vmatprep.subr.mxu0 0.0
        %589 = vmatpush1.msra.mxu0 0.0
        %590 = vmatprep.subr.mxu0 0.0
        %591 = vmatpush1.msra.mxu0 0.0
        %592 = vmatprep.subr.mxu0 0.0
        %593 = vmatpush1.msra.mxu0 0.0
        %594 = vmatprep.subr.mxu0 0.0
        %595 = vmatpush1.msra.mxu0 0.0
        %596 = vmatprep.subr.mxu0 0.0
        %597 = vmatpush1.msra.mxu0 0.0
        %598 = vmatprep.subr.mxu0 0.0
        %599 = vmatpush1.msra.mxu0 0.0
        %600 = vmatprep.mubr.f32.mxu0 0.0
        %601 = vmatmul.mubr.f32.gmra.mrb[0].mxu0 %v511
        %v602 = vpop.f32.mrb[0].mxu0
        %v603 = vadd.f32 %v534, %v602
        %v604 = vpop.f32.mrb[0].mxu0
        %605 = vmatprep.mubr.f32.mxu0 0.0
        %606 = vmatmul.mubr.f32.gmra.mrb[0].mxu0 %v512
        %v607 = vpop.f32.mrb[0].mxu0
        %v608 = vadd.f32 %v534, %v607
        %v609 = vpop.f32.mrb[0].mxu0
        %610 = vdwg.mxu0
        %v611 = vmax.f32 %v603, 0.0
        %v612 = vmax.f32 %v608, 0.0
        %v613 = vld [vmem:[#allocation8] sm:$0xff]
        %v614 = vld [vmem:[#allocation8 + $0x8] sm:$0xff]
        %v615 = vld [vmem:[#allocation8 + $0x10] sm:$0xff]
        %v616 = vld [vmem:[#allocation8 + $0x18] sm:$0xff]
        %v617 = vld [vmem:[#allocation8 + $0x20] sm:$0xff]
        %v618 = vld [vmem:[#allocation8 + $0x28] sm:$0xff]
        %v619 = vld [vmem:[#allocation8 + $0x30] sm:$0xff]
        %v620 = vld [vmem:[#allocation8 + $0x38] sm:$0xff]
        %v621 = vld [vmem:[#allocation8 + $0x40] sm:$0xff]
        %v622 = vld [vmem:[#allocation8 + $0x48] sm:$0xff]
        %v623 = vld [vmem:[#allocation8 + $0x50] sm:$0xff]
        %v624 = vld [vmem:[#allocation8 + $0x58] sm:$0xff]
        %v625 = vld [vmem:[#allocation8 + $0x60] sm:$0xff]
        %v626 = vld [vmem:[#allocation8 + $0x68] sm:$0xff]
        %v627 = vld [vmem:[#allocation8 + $0x70] sm:$0xff]
        %v628 = vld [vmem:[#allocation8 + $0x78] sm:$0xff]
        %v629 = vld [vmem:[%s6] sm:$0x1]
        %v631 = vlaneseq
        %v632 = vshrl.u32 %v631, 7
        %v633 = vsub.s32 0, %v632
        %v634 = vrot.slane %v629, %v633
        %636 = vmatprep.subr.mxu0 0.0
        %637 = vmatpush1.msra.mxu0 %v613
        %638 = vmatprep.subr.mxu0 0.0
        %639 = vmatpush1.msra.mxu0 %v614
        %640 = vmatprep.subr.mxu0 0.0
        %641 = vmatpush1.msra.mxu0 %v615
        %642 = vmatprep.subr.mxu0 0.0
        %643 = vmatpush1.msra.mxu0 %v616
        %644 = vmatprep.subr.mxu0 0.0
        %645 = vmatpush1.msra.mxu0 %v617
        %646 = vmatprep.subr.mxu0 0.0
        %647 = vmatpush1.msra.mxu0 %v618
        %648 = vmatprep.subr.mxu0 0.0
        %649 = vmatpush1.msra.mxu0 %v619
        %650 = vmatprep.subr.mxu0 0.0
        %651 = vmatpush1.msra.mxu0 %v620
        %652 = vmatprep.subr.mxu0 0.0
        %653 = vmatpush1.msra.mxu0 %v621
        %654 = vmatprep.subr.mxu0 0.0
        %655 = vmatpush1.msra.mxu0 %v622
        %656 = vmatprep.subr.mxu0 0.0
        %657 = vmatpush1.msra.mxu0 %v623
        %658 = vmatprep.subr.mxu0 0.0
        %659 = vmatpush1.msra.mxu0 %v624
        %660 = vmatprep.subr.mxu0 0.0
        %661 = vmatpush1.msra.mxu0 %v625
        %662 = vmatprep.subr.mxu0 0.0
        %663 = vmatpush1.msra.mxu0 %v626
        %664 = vmatprep.subr.mxu0 0.0
        %665 = vmatpush1.msra.mxu0 %v627
        %666 = vmatprep.subr.mxu0 0.0
        %667 = vmatpush1.msra.mxu0 %v628
        %668 = vmatprep.subr.mxu0 0.0
        %669 = vmatpush1.msra.mxu0 0.0
        %670 = vmatprep.subr.mxu0 0.0
        %671 = vmatpush1.msra.mxu0 0.0
        %672 = vmatprep.subr.mxu0 0.0
        %673 = vmatpush1.msra.mxu0 0.0
        %674 = vmatprep.subr.mxu0 0.0
        %675 = vmatpush1.msra.mxu0 0.0
        %676 = vmatprep.subr.mxu0 0.0
        %677 = vmatpush1.msra.mxu0 0.0
        %678 = vmatprep.subr.mxu0 0.0
        %679 = vmatpush1.msra.mxu0 0.0
        %680 = vmatprep.subr.mxu0 0.0
        %681 = vmatpush1.msra.mxu0 0.0
        %682 = vmatprep.subr.mxu0 0.0
        %683 = vmatpush1.msra.mxu0 0.0
        %684 = vmatprep.subr.mxu0 0.0
        %685 = vmatpush1.msra.mxu0 0.0
        %686 = vmatprep.subr.mxu0 0.0
        %687 = vmatpush1.msra.mxu0 0.0
        %688 = vmatprep.subr.mxu0 0.0
        %689 = vmatpush1.msra.mxu0 0.0
        %690 = vmatprep.subr.mxu0 0.0
        %691 = vmatpush1.msra.mxu0 0.0
        %692 = vmatprep.subr.mxu0 0.0
        %693 = vmatpush1.msra.mxu0 0.0
        %694 = vmatprep.subr.mxu0 0.0
        %695 = vmatpush1.msra.mxu0 0.0
        %696 = vmatprep.subr.mxu0 0.0
        %697 = vmatpush1.msra.mxu0 0.0
        %698 = vmatprep.subr.mxu0 0.0
        %699 = vmatpush1.msra.mxu0 0.0
        %700 = vmatprep.mubr.f32.mxu0 0.0
        %701 = vmatmul.mubr.f32.gmra.mrb[0].mxu0 %v611
        %v702 = vpop.f32.mrb[0].mxu0
        %v703 = vadd.f32 %v634, %v702
        %v704 = vpop.f32.mrb[0].mxu0
        %705 = vmatprep.mubr.f32.mxu0 0.0
        %706 = vmatmul.mubr.f32.gmra.mrb[0].mxu0 %v612
        %v707 = vpop.f32.mrb[0].mxu0
        %v708 = vadd.f32 %v634, %v707
        %v709 = vpop.f32.mrb[0].mxu0
        %710 = vdwg.mxu0
        %v711 = vmax.f32 %v703, 0.0
        %v712 = vmax.f32 %v708, 0.0
        %v713 = vld [vmem:[#allocation10] sm:$0xff]
        %v714 = vld [vmem:[#allocation10 + $0x8] sm:$0xff]
        %v715 = vld [vmem:[#allocation10 + $0x10] sm:$0xff]
        %v716 = vld [vmem:[#allocation10 + $0x18] sm:$0xff]
        %v717 = vld [vmem:[#allocation10 + $0x20] sm:$0xff]
        %v718 = vld [vmem:[#allocation10 + $0x28] sm:$0xff]
        %v719 = vld [vmem:[#allocation10 + $0x30] sm:$0xff]
        %v720 = vld [vmem:[#allocation10 + $0x38] sm:$0xff]
        %v721 = vld [vmem:[#allocation10 + $0x40] sm:$0xff]
        %v722 = vld [vmem:[#allocation10 + $0x48] sm:$0xff]
        %v723 = vld [vmem:[#allocation10 + $0x50] sm:$0xff]
        %v724 = vld [vmem:[#allocation10 + $0x58] sm:$0xff]
        %v725 = vld [vmem:[#allocation10 + $0x60] sm:$0xff]
        %v726 = vld [vmem:[#allocation10 + $0x68] sm:$0xff]
        %v727 = vld [vmem:[#allocation10 + $0x70] sm:$0xff]
        %v728 = vld [vmem:[#allocation10 + $0x78] sm:$0xff]
        %v729 = vld [vmem:[%s8] sm:$0x1]
        %v731 = vlaneseq
        %v732 = vshrl.u32 %v731, 7
        %v733 = vsub.s32 0, %v732
        %v734 = vrot.slane %v729, %v733
        %736 = vmatprep.subr.mxu0 0.0
        %737 = vmatpush1.msra.mxu0 %v713
        %738 = vmatprep.subr.mxu0 0.0
        %739 = vmatpush1.msra.mxu0 %v714
        %740 = vmatprep.subr.mxu0 0.0
        %741 = vmatpush1.msra.mxu0 %v715
        %742 = vmatprep.subr.mxu0 0.0
        %743 = vmatpush1.msra.mxu0 %v716
        %744 = vmatprep.subr.mxu0 0.0
        %745 = vmatpush1.msra.mxu0 %v717
        %746 = vmatprep.subr.mxu0 0.0
        %747 = vmatpush1.msra.mxu0 %v718
        %748 = vmatprep.subr.mxu0 0.0
        %749 = vmatpush1.msra.mxu0 %v719
        %750 = vmatprep.subr.mxu0 0.0
        %751 = vmatpush1.msra.mxu0 %v720
        %752 = vmatprep.subr.mxu0 0.0
        %753 = vmatpush1.msra.mxu0 %v721
        %754 = vmatprep.subr.mxu0 0.0
        %755 = vmatpush1.msra.mxu0 %v722
        %756 = vmatprep.subr.mxu0 0.0
        %757 = vmatpush1.msra.mxu0 %v723
        %758 = vmatprep.subr.mxu0 0.0
        %759 = vmatpush1.msra.mxu0 %v724
        %760 = vmatprep.subr.mxu0 0.0
        %761 = vmatpush1.msra.mxu0 %v725
        %762 = vmatprep.subr.mxu0 0.0
        %763 = vmatpush1.msra.mxu0 %v726
        %764 = vmatprep.subr.mxu0 0.0
        %765 = vmatpush1.msra.mxu0 %v727
        %766 = vmatprep.subr.mxu0 0.0
        %767 = vmatpush1.msra.mxu0 %v728
        %768 = vmatprep.subr.mxu0 0.0
        %769 = vmatpush1.msra.mxu0 0.0
        %770 = vmatprep.subr.mxu0 0.0
        %771 = vmatpush1.msra.mxu0 0.0
        %772 = vmatprep.subr.mxu0 0.0
        %773 = vmatpush1.msra.mxu0 0.0
        %774 = vmatprep.subr.mxu0 0.0
        %775 = vmatpush1.msra.mxu0 0.0
        %776 = vmatprep.subr.mxu0 0.0
        %777 = vmatpush1.msra.mxu0 0.0
        %778 = vmatprep.subr.mxu0 0.0
        %779 = vmatpush1.msra.mxu0 0.0
        %780 = vmatprep.subr.mxu0 0.0
        %781 = vmatpush1.msra.mxu0 0.0
        %782 = vmatprep.subr.mxu0 0.0
        %783 = vmatpush1.msra.mxu0 0.0
        %784 = vmatprep.subr.mxu0 0.0
        %785 = vmatpush1.msra.mxu0 0.0
        %786 = vmatprep.subr.mxu0 0.0
        %787 = vmatpush1.msra.mxu0 0.0
        %788 = vmatprep.subr.mxu0 0.0
        %789 = vmatpush1.msra.mxu0 0.0
        %790 = vmatprep.subr.mxu0 0.0
        %791 = vmatpush1.msra.mxu0 0.0
        %792 = vmatprep.subr.mxu0 0.0
        %793 = vmatpush1.msra.mxu0 0.0
        %794 = vmatprep.subr.mxu0 0.0
        %795 = vmatpush1.msra.mxu0 0.0
        %796 = vmatprep.subr.mxu0 0.0
        %797 = vmatpush1.msra.mxu0 0.0
        %798 = vmatprep.subr.mxu0 0.0
        %799 = vmatpush1.msra.mxu0 0.0
        %800 = vmatprep.mubr.f32.mxu0 0.0
        %801 = vmatmul.mubr.f32.gmra.mrb[0].mxu0 %v711
        %v802 = vpop.f32.mrb[0].mxu0
        %v803 = vadd.f32 %v734, %v802
        %v804 = vpop.f32.mrb[0].mxu0
        %805 = vmatprep.mubr.f32.mxu0 0.0
        %806 = vmatmul.mubr.f32.gmra.mrb[0].mxu0 %v712
        %v807 = vpop.f32.mrb[0].mxu0
        %v808 = vadd.f32 %v734, %v807
        %v809 = vpop.f32.mrb[0].mxu0
        %810 = vdwg.mxu0
        %811 = vst [vmem:[%s408] sm:$0xff] %v803
        %812 = vst [vmem:[%s408 + $0x8] sm:$0xff] %v808
        %s813 = sand.u32 %s230, 1
        %s814 = scalar_lea.sflag [#allocation4], %s813
        %s815 = sand.u32 %s230, 1
        %s816 = smul.addr %s815, 16
        %s817 = scalar_lea.vmem [#allocation11], %s816
        // Predicated region
        $region77: #{tpu_custom_call.1} parent=55 // pred_check
          %p818 = pneg %p240
        $region78: #{tpu_custom_call.1} parent=55 // pred_check_branch
          %820 = sbr.rel (%p818) target = $region80
        $region79: #{tpu_custom_call.1} parent=55 // pred_region
          %s821 = smul.u32 2, %s28
          %s823 = ssub.s32 256, 256
          %824 = vsyncadd %s814, %s823
          %s825 = smul.addr %s821, 128
          %s826 = scalar_lea.hbm %s9, %s825
          %s827 = sshll.u32 %s817, 4
          %s828 = int_to_ptr.vmem [resolvable:$true] %s827
          %833 = dma.vmem_to_hbm [thread:$0]  %s828, 256, %s826, %s814, 128, 128, 8
        $region80: #{tpu_custom_call.1} parent=55 // pred_fallthru
          _
      $region56: #{tpu_custom_call.1} parent=5 // pred_fallthru
        _
      %p834 = scmp.le.s32.totalorder 2, %s23
      // Predicated region
      $region81: #{tpu_custom_call.1} parent=5 // pred_check
        %p835 = pneg %p834
      $region82: #{tpu_custom_call.1} parent=5 // pred_check_branch
        %837 = sbr.rel (%p835) target = $region84
      $region83: #{tpu_custom_call.1} parent=5 // pred_region
        %s838 = ssub.s32 %s23, 2
        // Predicated region
        $region85: #{tpu_custom_call.1} parent=83 // pred_check
          %p839 = pneg %p246
        $region86: #{tpu_custom_call.1} parent=83 // pred_check_branch
          %841 = sbr.rel (%p839) target = $region88
        $region87: #{tpu_custom_call.1} parent=83 // pred_region
          %s842 = sand.u32 %s231, 1
          %s843 = scalar_lea.sflag [#allocation4], %s842
          %s844 = sand.u32 %s231, 1
          %s845 = smul.addr %s844, 16
          %s846 = scalar_lea.vmem [#allocation11], %s845
          %847 = dma.done %s843, 256
        $region88: #{tpu_custom_call.1} parent=83 // pred_fallthru
          _
      $region84: #{tpu_custom_call.1} parent=5 // pred_fallthru
        _
    $region6: #{tpu_custom_call.1} parent=1 // loop_footer
      %s27 = sadd.s32 1, %s23
    $region7: #{tpu_custom_call.1} parent=1 // loop_footer_branch
      %22 = sbr.rel target = $region3
    $region8: #{tpu_custom_call.1} parent=1 // loop_exit
      _
    %848 = vsyncpa [#allocation3], 1
    %s849 = scalar_lea.sflag [#allocation3], 1
    %850 = vsyncpa %s849, 1
    %851 = vsyncpa [#allocation6], 1
    %852 = vsyncpa [#allocation9], 1
    %853 = vsyncpa [#allocation4], 1
    %s854 = scalar_lea.sflag [#allocation4], 1
    %855 = vsyncpa %s854, 1

</llo_original>
